<compile_context>
chip_gen: v5e
topology: v5e:2x2
jax: 0.10.0
libtpu: 0.0.40
codegen_flags: <defaults>
</compile_context>

<pallas_src>
import jax
import jax.numpy as jnp
from jax.experimental import pallas as pl
from jax.experimental.pallas import tpu as pltpu


def _round_up(x, m):
    return ((x + m - 1) // m) * m


def _cdiv(a, b):
    return -(-a // b)


def mlp_kernel(x_ref, w1_ref, w2_ref, w3_ref, b1_ref, b2_ref, b3_ref, o_ref):
    # x_ref: (TM, in_c) f32      w1: (in_c, Ph) bf16   w2: (Ph, Ph) bf16
    # w3: (Ph, Pout) bf16        b1/b2: (1, Ph) f32    b3: (1, Pout) f32
    # o_ref: (TM, Pout) bf16
    x = x_ref[...].astype(jnp.bfloat16)  # in-kernel cast: cheap VPU work hidden under DMA

    # fc1 -> tanh (bf16 MXU inputs, f32 accumulate, f32 elementwise)
    h = jnp.dot(x, w1_ref[...], preferred_element_type=jnp.float32)
    h = jnp.tanh(h + b1_ref[...])

    # fc2 -> sigmoid; sigmoid(z) == 0.5*(tanh(z/2)+1): one EUP op instead of two
    h = jnp.dot(h.astype(jnp.bfloat16), w2_ref[...], preferred_element_type=jnp.float32)
    h = 0.5 * (jnp.tanh(0.5 * (h + b2_ref[...])) + 1.0)

    # fc3 (no activation); narrow bf16 store (lane-dense, Pout wide)
    out = jnp.dot(h.astype(jnp.bfloat16), w3_ref[...], preferred_element_type=jnp.float32)
    o_ref[...] = (out + b3_ref[...]).astype(o_ref.dtype)


def _vmem_limit_bytes(tm, in_c, Ph, Pout):
    # Pipeline buffers are double-buffered by default (even constant-index
    # blocks), plus the in-kernel f32 intermediates. 2x headroom for compiler
    # scratch, floored at 16 MiB and capped well under v7x's 64 MiB physical VMEM.
    dbl = 2
    est = (
        dbl * tm * in_c * 4                              # x tiles (f32)
        + dbl * tm * Pout * 2                            # output tiles (bf16)
        + dbl * (in_c * Ph + Ph * Ph + Ph * Pout) * 2    # resident bf16 weights
        + dbl * 8 * (2 * Ph + Pout) * 4                  # biases (sublane-padded)
        + 3 * tm * Ph * 4                                # f32 intermediates
    )
    return int(min(max(2 * est + (4 << 20), 16 << 20), 48 << 20))


def net_forward(x, params, tm=None):
    w1, b1, w2, b2, w3, b3 = params
    B, in_c = x.shape
    hid_c = w1.shape[1]
    out_c = w3.shape[1]

    # Per-layer lane-dense padded dims (input stays at its natural width).
    Ph = _round_up(hid_c, 128)
    Pout = _round_up(out_c, 128)

    # Weights: pad only where needed, cast to bf16, keep VMEM-resident.
    w1_p = jnp.zeros((in_c, Ph), jnp.float32).at[:, :hid_c].set(w1).astype(jnp.bfloat16)
    w2_p = jnp.zeros((Ph, Ph), jnp.float32).at[:hid_c, :hid_c].set(w2).astype(jnp.bfloat16)
    w3_p = jnp.zeros((Ph, Pout), jnp.float32).at[:hid_c, :out_c].set(w3).astype(jnp.bfloat16)
    # NOTE: zero padding keeps the math exact (sigmoid(0)=0.5 in padded hidden
    # columns is killed by the zero-padded rows of w3_p).
    b1_p = jnp.zeros((1, Ph), jnp.float32).at[:, :hid_c].set(b1.reshape(1, -1))
    b2_p = jnp.zeros((1, Ph), jnp.float32).at[:, :hid_c].set(b2.reshape(1, -1))
    b3_p = jnp.zeros((1, Pout), jnp.float32).at[:, :out_c].set(b3.reshape(1, -1))

    # Batch tiling: target ~2048 rows per tile at 128-wide features (shrink for
    # wider hidden layers so f32 intermediates stay comfortably inside VMEM).
    # Derive tm from cdiv(B, n_tiles) so padding never overshoots, and prefer an
    # even tile count so ("parallel",) can split across both v7x TensorCores.
    if tm is None:
        target = max(256, (2048 * 128) // Ph)
        n_tiles = max(1, _cdiv(B, target))
        if n_tiles > 1 and n_tiles % 2:
            n_tiles += 1
        tm = _round_up(_cdiv(B, n_tiles), 16)
    B_pad = _round_up(B, tm)

    # Pad only the batch dim, only if needed (no feature pad, no host-side cast).
    x_in = x if B_pad == B else jnp.zeros((B_pad, in_c), x.dtype).at[:B].set(x)

    out = pl.pallas_call(
        mlp_kernel,
        out_shape=jax.ShapeDtypeStruct((B_pad, Pout), jnp.bfloat16),
        grid_spec=pltpu.PrefetchScalarGridSpec(
            num_scalar_prefetch=0,
            grid=(B_pad // tm,),
            in_specs=[
                pl.BlockSpec((tm, in_c), lambda i: (i, 0)),      # x: pipelined over batch
                pl.BlockSpec((in_c, Ph), lambda i: (0, 0)),      # w1: resident
                pl.BlockSpec((Ph, Ph), lambda i: (0, 0)),        # w2: resident
                pl.BlockSpec((Ph, Pout), lambda i: (0, 0)),      # w3: resident
                pl.BlockSpec((1, Ph), lambda i: (0, 0)),         # b1: resident
                pl.BlockSpec((1, Ph), lambda i: (0, 0)),         # b2: resident
                pl.BlockSpec((1, Pout), lambda i: (0, 0)),       # b3: resident
            ],
            out_specs=pl.BlockSpec((tm, Pout), lambda i: (i, 0)),  # lane-dense bf16 output
        ),
        compiler_params=pltpu.CompilerParams(
            dimension_semantics=("parallel",),  # megacore-shard batch tiles (v7x)
            vmem_limit_bytes=_vmem_limit_bytes(tm, in_c, Ph, Pout),
        ),
    )(x_in, w1_p, w2_p, w3_p, b1_p, b2_p, b3_p)

    # Tiny epilogue: slice off padding and restore the caller's dtype.
    return out[:B, :out_c].astype(x.dtype)


def init_params(key, in_channels, hidden_channels, out_channels):
    # Deterministic init mimicking nn.Linear default: U(-1/sqrt(fan_in), +1/sqrt(fan_in)).
    def linear(key, fan_in, fan_out):
        kw, kb = jax.random.split(key)
        bound = 1.0 / jnp.sqrt(float(fan_in))
        # stored as (fan_in, fan_out) == W^T so that y = x @ W_stored + b
        w = jax.random.uniform(kw, (fan_in, fan_out), jnp.float32, -bound, bound)
        b = jax.random.uniform(kb, (1, fan_out), jnp.float32, -bound, bound)
        return w, b

    k1, k2, k3 = jax.random.split(key, 3)
    w1, b1 = linear(k1, in_channels, hidden_channels)
    w2, b2 = linear(k2, hidden_channels, hidden_channels)
    w3, b3 = linear(k3, hidden_channels, out_channels)
    return (w1, b1, w2, b2, w3, b3)


def reference_forward(x, params):
    w1, b1, w2, b2, w3, b3 = params
    h = jnp.tanh(x @ w1 + b1)
    h = jax.nn.sigmoid(h @ w2 + b2)
    return h @ w3 + b3


if __name__ == "__main__":
    key = jax.random.PRNGKey(0)
    kx, kp = jax.random.split(key)

    batch, in_channels, hidden_channels, out_channels = 8, 16, 32, 8
    x = jax.random.normal(kx, (batch, in_channels), jnp.float32)
    params = init_params(kp, in_channels, hidden_channels, out_channels)

    out = net_forward(x, params)
    out = jax.block_until_ready(out)

    ref = reference_forward(x, params)
    assert out.shape == (batch, out_channels)
    # bf16 MXU operands + bf16 output store -> compare with bf16-level tolerance.
    # (Keep an f32 MXU path if tighter accuracy is ever required.)
    assert jnp.allclose(out, ref, atol=5e-2, rtol=5e-2), (
        float(jnp.max(jnp.abs(out - ref)))
    )

    print("KERNEL_OK")
</pallas_src>

<mosaic_0001>
module attributes {stable_mosaic.version = 11 : i64} {
  func.func @mlp_kernel(%arg0: i32, %arg1: memref<16x16xf32, #tpu.memory_space<vmem>>, %arg2: memref<16x128xbf16, #tpu.memory_space<vmem>>, %arg3: memref<128x128xbf16, #tpu.memory_space<vmem>>, %arg4: memref<128x128xbf16, #tpu.memory_space<vmem>>, %arg5: memref<1x128xf32, #tpu.memory_space<vmem>>, %arg6: memref<1x128xf32, #tpu.memory_space<vmem>>, %arg7: memref<1x128xf32, #tpu.memory_space<vmem>>, %arg8: memref<16x128xbf16, #tpu.memory_space<vmem>>) attributes {dimension_semantics = [#tpu.dimension_semantics<parallel>], iteration_bounds = array<i64: 1>, scalar_prefetch = 0 : i64, scratch_operands = 0 : i64, tpu.core_type = #tpu.core_type<tc>, window_params = [{transform_indices = @transform_0, window_bounds = array<i64: 16, 16>}, {pipeline_mode = #tpu.pipeline_mode<synchronous>, transform_indices = @transform_1, window_bounds = array<i64: 16, 128>}, {pipeline_mode = #tpu.pipeline_mode<synchronous>, transform_indices = @transform_2, window_bounds = array<i64: 128, 128>}, {pipeline_mode = #tpu.pipeline_mode<synchronous>, transform_indices = @transform_3, window_bounds = array<i64: 128, 128>}, {pipeline_mode = #tpu.pipeline_mode<synchronous>, transform_indices = @transform_4, window_bounds = array<i64: 1, 128>}, {pipeline_mode = #tpu.pipeline_mode<synchronous>, transform_indices = @transform_5, window_bounds = array<i64: 1, 128>}, {pipeline_mode = #tpu.pipeline_mode<synchronous>, transform_indices = @transform_6, window_bounds = array<i64: 1, 128>}, {transform_indices = @transform_7, window_bounds = array<i64: 16, 128>}]} {
    %c0 = arith.constant 0 : index
    %c0_0 = arith.constant 0 : index
    %0 = vector.load %arg1[%c0, %c0_0] : memref<16x16xf32, #tpu.memory_space<vmem>>, vector<16x16xf32>
    %1 = arith.truncf %0 : vector<16x16xf32> to vector<16x16xbf16>
    %c0_1 = arith.constant 0 : index
    %c0_2 = arith.constant 0 : index
    %2 = vector.load %arg2[%c0_1, %c0_2] : memref<16x128xbf16, #tpu.memory_space<vmem>>, vector<16x128xbf16>
    %cst = arith.constant dense<0.000000e+00> : vector<16x128xf32>
    %3 = tpu.matmul %1, %2, %cst {dimension_numbers = #tpu.dot_dimension_numbers<[1], [0], [0], [1], [0, 0, 1, 1], [], []>} : vector<16x16xbf16>, vector<16x128xbf16>, vector<16x128xf32> -> vector<16x128xf32>
    %c0_3 = arith.constant 0 : index
    %c0_4 = arith.constant 0 : index
    %4 = vector.load %arg5[%c0_3, %c0_4] : memref<1x128xf32, #tpu.memory_space<vmem>>, vector<1x128xf32>
    %5 = vector.broadcast %4 : vector<1x128xf32> to vector<16x128xf32>
    %6 = arith.addf %3, %5 : vector<16x128xf32>
    %7 = math.tanh %6 : vector<16x128xf32>
    %8 = arith.truncf %7 : vector<16x128xf32> to vector<16x128xbf16>
    %c0_5 = arith.constant 0 : index
    %c0_6 = arith.constant 0 : index
    %9 = vector.load %arg3[%c0_5, %c0_6] : memref<128x128xbf16, #tpu.memory_space<vmem>>, vector<128x128xbf16>
    %cst_7 = arith.constant dense<0.000000e+00> : vector<16x128xf32>
    %10 = tpu.matmul %8, %9, %cst_7 {dimension_numbers = #tpu.dot_dimension_numbers<[1], [0], [0], [1], [0, 0, 1, 1], [], []>} : vector<16x128xbf16>, vector<128x128xbf16>, vector<16x128xf32> -> vector<16x128xf32>
    %c0_8 = arith.constant 0 : index
    %c0_9 = arith.constant 0 : index
    %11 = vector.load %arg6[%c0_8, %c0_9] : memref<1x128xf32, #tpu.memory_space<vmem>>, vector<1x128xf32>
    %12 = vector.broadcast %11 : vector<1x128xf32> to vector<16x128xf32>
    %13 = arith.addf %10, %12 : vector<16x128xf32>
    %cst_10 = arith.constant 5.000000e-01 : f32
    %14 = vector.broadcast %cst_10 : f32 to vector<16x128xf32>
    %15 = arith.mulf %14, %13 : vector<16x128xf32>
    %16 = math.tanh %15 : vector<16x128xf32>
    %cst_11 = arith.constant 1.000000e+00 : f32
    %17 = vector.broadcast %cst_11 : f32 to vector<16x128xf32>
    %18 = arith.addf %16, %17 : vector<16x128xf32>
    %cst_12 = arith.constant 5.000000e-01 : f32
    %19 = vector.broadcast %cst_12 : f32 to vector<16x128xf32>
    %20 = arith.mulf %19, %18 : vector<16x128xf32>
    %21 = arith.truncf %20 : vector<16x128xf32> to vector<16x128xbf16>
    %c0_13 = arith.constant 0 : index
    %c0_14 = arith.constant 0 : index
    %22 = vector.load %arg4[%c0_13, %c0_14] : memref<128x128xbf16, #tpu.memory_space<vmem>>, vector<128x128xbf16>
    %cst_15 = arith.constant dense<0.000000e+00> : vector<16x128xf32>
    %23 = tpu.matmul %21, %22, %cst_15 {dimension_numbers = #tpu.dot_dimension_numbers<[1], [0], [0], [1], [0, 0, 1, 1], [], []>} : vector<16x128xbf16>, vector<128x128xbf16>, vector<16x128xf32> -> vector<16x128xf32>
    %c0_16 = arith.constant 0 : index
    %c0_17 = arith.constant 0 : index
    %24 = vector.load %arg7[%c0_16, %c0_17] : memref<1x128xf32, #tpu.memory_space<vmem>>, vector<1x128xf32>
    %25 = vector.broadcast %24 : vector<1x128xf32> to vector<16x128xf32>
    %26 = arith.addf %23, %25 : vector<16x128xf32>
    %27 = arith.truncf %26 : vector<16x128xf32> to vector<16x128xbf16>
    %c0_18 = arith.constant 0 : index
    %c0_19 = arith.constant 0 : index
    %28 = vector.load %arg8[%c0_18, %c0_19] : memref<16x128xbf16, #tpu.memory_space<vmem>>, vector<16x128xbf16>
    tpu.vector_store %arg8[%c0_18, %c0_19], %27 {strides = array<i32>} : memref<16x128xbf16, #tpu.memory_space<vmem>>, vector<16x128xbf16>,
    return
  }
  func.func @transform_0(%arg0: i32) -> (i32, i32) {
    %c0_i32 = arith.constant 0 : i32
    %c0_i32_0 = arith.constant 0 : i32
    return %arg0, %c0_i32 : i32, i32
  }
  func.func @transform_1(%arg0: i32) -> (i32, i32) {
    %c0_i32 = arith.constant 0 : i32
    %c0_i32_0 = arith.constant 0 : i32
    %c0_i32_1 = arith.constant 0 : i32
    return %c0_i32, %c0_i32_0 : i32, i32
  }
  func.func @transform_2(%arg0: i32) -> (i32, i32) {
    %c0_i32 = arith.constant 0 : i32
    %c0_i32_0 = arith.constant 0 : i32
    %c0_i32_1 = arith.constant 0 : i32
    return %c0_i32, %c0_i32_0 : i32, i32
  }
  func.func @transform_3(%arg0: i32) -> (i32, i32) {
    %c0_i32 = arith.constant 0 : i32
    %c0_i32_0 = arith.constant 0 : i32
    %c0_i32_1 = arith.constant 0 : i32
    return %c0_i32, %c0_i32_0 : i32, i32
  }
  func.func @transform_4(%arg0: i32) -> (i32, i32) {
    %c0_i32 = arith.constant 0 : i32
    %c0_i32_0 = arith.constant 0 : i32
    %c0_i32_1 = arith.constant 0 : i32
    return %c0_i32, %c0_i32_0 : i32, i32
  }
  func.func @transform_5(%arg0: i32) -> (i32, i32) {
    %c0_i32 = arith.constant 0 : i32
    %c0_i32_0 = arith.constant 0 : i32
    %c0_i32_1 = arith.constant 0 : i32
    return %c0_i32, %c0_i32_0 : i32, i32
  }
  func.func @transform_6(%arg0: i32) -> (i32, i32) {
    %c0_i32 = arith.constant 0 : i32
    %c0_i32_0 = arith.constant 0 : i32
    %c0_i32_1 = arith.constant 0 : i32
    return %c0_i32, %c0_i32_0 : i32, i32
  }
  func.func @transform_7(%arg0: i32) -> (i32, i32) {
    %c0_i32 = arith.constant 0 : i32
    %c0_i32_0 = arith.constant 0 : i32
    return %arg0, %c0_i32 : i32, i32
  }
}

</mosaic_0001>

<llo_original>
// kernel: tpu_custom_call.1
$region0: #{tpu_custom_call.1}
  #allocation0 [shape = 'u32[]', space=smem, size = 0x4, offset = 0x4, fixed_abs, tag = 'smem constant byte address 0x4 - core index']
  #allocation1 [shape = 'u32[72,128]{1,0:T(1,128)}', space=vmem, size = 0x9000, scoped, tag = 'internal scratch']
  %s0 = inlined_call_operand.hbm [shape: f32[16,16], index: 0, kind: input, shape index: {}]
  %s1 = inlined_call_operand.hbm [shape: bf16[16,128], index: 1, kind: input, shape index: {}]
  %s2 = inlined_call_operand.hbm [shape: bf16[128,128], index: 2, kind: input, shape index: {}]
  %s3 = inlined_call_operand.hbm [shape: bf16[128,128], index: 3, kind: input, shape index: {}]
  %s4 = inlined_call_operand.vmem [shape: f32[1,128], index: 4, kind: input, shape index: {}]
  %s5 = inlined_call_operand.vmem [shape: f32[1,128], index: 5, kind: input, shape index: {}]
  %s6 = inlined_call_operand.vmem [shape: f32[1,128], index: 6, kind: input, shape index: {}]
  %s7 = inlined_call_operand.hbm [shape: bf16[16,128], index: 7, kind: output, shape index: {}]
  %s8 = sld [smem:[#allocation0]]
  $region54: #{tpu_custom_call.1} parent=0
    _
  %s10 = ssub.s32 1, %s8
  %s11 = scalar_select 0, %s10, %s8
  $region1: #{tpu_custom_call.1} parent=0
    #allocation2 [shape = 'u8[8192]{0}', space=vmem, size = 0x2000, scoped, tag = 'input window, operand 0, single buffered']
    #allocation3 [shape = 's32[1]{0}', space=sflag, size = 0x4, scoped, tag = 'scoped memory for tpu_custom_call.1']
    #allocation4 [shape = 's32[1]{0}', space=sflag, size = 0x4, scoped, tag = 'scoped memory for tpu_custom_call.1']
    #allocation5 [shape = 'u8[4096]{0}', space=vmem, size = 0x1000, scoped, tag = 'input window, operand 1, single buffered']
    #allocation6 [shape = 's32[1]{0}', space=sflag, size = 0x4, scoped, tag = 'scoped memory for tpu_custom_call.1']
    #allocation7 [shape = 'u8[32768]{0}', space=vmem, size = 0x8000, scoped, tag = 'input window, operand 2, single buffered']
    #allocation8 [shape = 'u8[32768]{0}', space=vmem, size = 0x8000, scoped, tag = 'input window, operand 3, single buffered']
    #allocation9 [shape = 's32[1]{0}', space=sflag, size = 0x4, scoped, tag = 'scoped memory for tpu_custom_call.1']
    #allocation10 [shape = 'u8[4096]{0}', space=vmem, size = 0x1000, scoped, tag = 'output window, operand 0, single buffered']
    %12 = vsyncpa [#allocation3], 0
    %13 = vsyncpa [#allocation6], 0
    %14 = vsyncpa [#allocation9], 0
    %15 = vsyncpa [#allocation4], 0
    // Predicated region
    $region2: #{tpu_custom_call.1} parent=1 // pred_check
      _
    $region3: #{tpu_custom_call.1} parent=1 // pred_check_branch
      %17 = sbr.rel (0) target = $region5
    $region4: #{tpu_custom_call.1} parent=1 // pred_region
      %19 = vsyncadd [#allocation3], 0
      %s20 = sshll.u32 %s0, 4
      %s21 = int_to_ptr.hbm [resolvable:$true] %s20
      %s22 = sshll.u32 [#allocation2], 4
      %s23 = int_to_ptr.vmem [resolvable:$true] %s22
      %28 = dma.hbm_to_vmem [thread:$0]  %s21, 256, %s23, [#allocation3], 128, 128, 8
    $region5: #{tpu_custom_call.1} parent=1 // pred_fallthru
      _
    // Predicated region
    $region6: #{tpu_custom_call.1} parent=1 // pred_check
      _
    $region7: #{tpu_custom_call.1} parent=1 // pred_check_branch
      %30 = sbr.rel (0) target = $region9
    $region8: #{tpu_custom_call.1} parent=1 // pred_region
      %32 = vsyncadd [#allocation6], 0
      %s33 = sshll.u32 %s1, 4
      %s34 = int_to_ptr.hbm [resolvable:$true] %s33
      %s35 = sshll.u32 [#allocation5], 4
      %s36 = int_to_ptr.vmem [resolvable:$true] %s35
      %41 = dma.hbm_to_vmem [thread:$0]  %s34, 128, %s36, [#allocation6], 64, 64, 4
    $region9: #{tpu_custom_call.1} parent=1 // pred_fallthru
      _
    // Predicated region
    $region10: #{tpu_custom_call.1} parent=1 // pred_check
      _
    $region11: #{tpu_custom_call.1} parent=1 // pred_check_branch
      %43 = sbr.rel (0) target = $region13
    $region12: #{tpu_custom_call.1} parent=1 // pred_region
      %45 = vsyncadd [#allocation6], 0
      %s46 = sshll.u32 %s2, 4
      %s47 = int_to_ptr.hbm [resolvable:$true] %s46
      %s48 = sshll.u32 [#allocation7], 4
      %s49 = int_to_ptr.vmem [resolvable:$true] %s48
      %54 = dma.hbm_to_vmem [thread:$0]  %s47, 1024, %s49, [#allocation6], 64, 64, 4
    $region13: #{tpu_custom_call.1} parent=1 // pred_fallthru
      _
    // Predicated region
    $region14: #{tpu_custom_call.1} parent=1 // pred_check
      _
    $region15: #{tpu_custom_call.1} parent=1 // pred_check_branch
      %56 = sbr.rel (0) target = $region17
    $region16: #{tpu_custom_call.1} parent=1 // pred_region
      %58 = vsyncadd [#allocation9], 0
      %s59 = sshll.u32 %s3, 4
      %s60 = int_to_ptr.hbm [resolvable:$true] %s59
      %s61 = sshll.u32 [#allocation8], 4
      %s62 = int_to_ptr.vmem [resolvable:$true] %s61
      %67 = dma.hbm_to_vmem [thread:$0]  %s60, 1024, %s62, [#allocation9], 64, 64, 4
    $region17: #{tpu_custom_call.1} parent=1 // pred_fallthru
      _
    // Predicated region
    $region18: #{tpu_custom_call.1} parent=1 // pred_check
      _
    $region19: #{tpu_custom_call.1} parent=1 // pred_check_branch
      %69 = sbr.rel (0) target = $region21
    $region20: #{tpu_custom_call.1} parent=1 // pred_region
      _
    $region21: #{tpu_custom_call.1} parent=1 // pred_fallthru
      _
    // Predicated region
    $region22: #{tpu_custom_call.1} parent=1 // pred_check
      _
    $region23: #{tpu_custom_call.1} parent=1 // pred_check_branch
      %71 = sbr.rel (0) target = $region25
    $region24: #{tpu_custom_call.1} parent=1 // pred_region
      _
    $region25: #{tpu_custom_call.1} parent=1 // pred_fallthru
      _
    // Predicated region
    $region26: #{tpu_custom_call.1} parent=1 // pred_check
      _
    $region27: #{tpu_custom_call.1} parent=1 // pred_check_branch
      %73 = sbr.rel (0) target = $region29
    $region28: #{tpu_custom_call.1} parent=1 // pred_region
      _
    $region29: #{tpu_custom_call.1} parent=1 // pred_fallthru
      _
    // Predicated region
    $region30: #{tpu_custom_call.1} parent=1 // pred_check
      _
    $region31: #{tpu_custom_call.1} parent=1 // pred_check_branch
      %75 = sbr.rel (0) target = $region33
    $region32: #{tpu_custom_call.1} parent=1 // pred_region
      %77 = dma.done [#allocation3], 256
    $region33: #{tpu_custom_call.1} parent=1 // pred_fallthru
      _
    // Predicated region
    $region34: #{tpu_custom_call.1} parent=1 // pred_check
      _
    $region35: #{tpu_custom_call.1} parent=1 // pred_check_branch
      %79 = sbr.rel (0) target = $region37
    $region36: #{tpu_custom_call.1} parent=1 // pred_region
      %81 = dma.done [#allocation6], 128
    $region37: #{tpu_custom_call.1} parent=1 // pred_fallthru
      _
    // Predicated region
    $region38: #{tpu_custom_call.1} parent=1 // pred_check
      _
    $region39: #{tpu_custom_call.1} parent=1 // pred_check_branch
      %83 = sbr.rel (0) target = $region41
    $region40: #{tpu_custom_call.1} parent=1 // pred_region
      %85 = dma.done [#allocation6], 1024
    $region41: #{tpu_custom_call.1} parent=1 // pred_fallthru
      _
    // Predicated region
    $region42: #{tpu_custom_call.1} parent=1 // pred_check
      _
    $region43: #{tpu_custom_call.1} parent=1 // pred_check_branch
      %87 = sbr.rel (0) target = $region45
    $region44: #{tpu_custom_call.1} parent=1 // pred_region
      %89 = dma.done [#allocation9], 1024
    $region45: #{tpu_custom_call.1} parent=1 // pred_fallthru
      _
    %v91 = vld [vmem:[#allocation2] sm:$0xff]
    %v92 = vld [vmem:[#allocation2 + $0x8] sm:$0xff]
    %v93 = vpack.c.bf16 %v92, %v91
    %v94 = vld [vmem:[#allocation5] sm:$0xf]
    %v95 = vld [vmem:[#allocation5 + $0x4] sm:$0xf]
    %v96 = vld [vmem:[%s4] sm:$0x1]
    %v98 = vperm.slane %v96, 0
    %v102 = vunpack.c.l.b16 %v94
    %v103 = vunpack.c.l.b16 %v95
    %v104 = vpack.c.b16 %v103, %v102
    %vm106 = vcmask 130048
    %v108 = vsel %vm106, %v93, 0
    %110 = vmatpush.bf16.msra.mxu0 0
    %111 = vmatpush.bf16.msra.mxu0 0
    %112 = vmatpush.bf16.msra.mxu0 0
    %113 = vmatpush.bf16.msra.mxu0 0
    %114 = vmatpush.bf16.msra.mxu0 0
    %115 = vmatpush.bf16.msra.mxu0 0
    %116 = vmatpush.bf16.msra.mxu0 0
    %117 = vmatpush.bf16.msra.mxu0 %v104
    %118 = vmatmul.bf16.gmra.mxu0 %v108
    %v119 = vpop.f32.mrf.mxu0
    %v120 = vadd.f32 %v98, %v119
    %v121 = vpop.f32.mrf.mxu0
    %v122 = vadd.f32 %v98, %v121
    %123 = vdwg.mxu0
    %v124 = vtanh.pop %v120
    %v125 = vtanh.pop %v122
    %v126 = vpack.c.bf16 %v125, %v124
    %v127 = vld [vmem:[#allocation7] sm:$0xf]
    %v128 = vld [vmem:[#allocation7 + $0x4] sm:$0xf]
    %v129 = vld [vmem:[#allocation7 + $0x8] sm:$0xf]
    %v130 = vld [vmem:[#allocation7 + $0xc] sm:$0xf]
    %v131 = vld [vmem:[#allocation7 + $0x10] sm:$0xf]
    %v132 = vld [vmem:[#allocation7 + $0x14] sm:$0xf]
    %v133 = vld [vmem:[#allocation7 + $0x18] sm:$0xf]
    %v134 = vld [vmem:[#allocation7 + $0x1c] sm:$0xf]
    %v135 = vld [vmem:[#allocation7 + $0x20] sm:$0xf]
    %v136 = vld [vmem:[#allocation7 + $0x24] sm:$0xf]
    %v137 = vld [vmem:[#allocation7 + $0x28] sm:$0xf]
    %v138 = vld [vmem:[#allocation7 + $0x2c] sm:$0xf]
    %v139 = vld [vmem:[#allocation7 + $0x30] sm:$0xf]
    %v140 = vld [vmem:[#allocation7 + $0x34] sm:$0xf]
    %v141 = vld [vmem:[#allocation7 + $0x38] sm:$0xf]
    %v142 = vld [vmem:[#allocation7 + $0x3c] sm:$0xf]
    %v143 = vld [vmem:[%s5] sm:$0x1]
    %v145 = vperm.slane %v143, 0
    %v163 = vunpack.c.l.b16 %v127
    %v164 = vunpack.c.l.b16 %v128
    %v165 = vunpack.c.l.b16 %v129
    %v166 = vunpack.c.l.b16 %v130
    %v167 = vunpack.c.l.b16 %v131
    %v168 = vunpack.c.l.b16 %v132
    %v169 = vunpack.c.l.b16 %v133
    %v170 = vunpack.c.l.b16 %v134
    %v171 = vunpack.c.l.b16 %v135
    %v172 = vunpack.c.l.b16 %v136
    %v173 = vunpack.c.l.b16 %v137
    %v174 = vunpack.c.l.b16 %v138
    %v175 = vunpack.c.l.b16 %v139
    %v176 = vunpack.c.l.b16 %v140
    %v177 = vunpack.c.l.b16 %v141
    %v178 = vunpack.c.l.b16 %v142
    %v179 = vpack.c.b16 %v164, %v163
    %v180 = vpack.c.b16 %v166, %v165
    %v181 = vpack.c.b16 %v168, %v167
    %v182 = vpack.c.b16 %v170, %v169
    %v183 = vpack.c.b16 %v172, %v171
    %v184 = vpack.c.b16 %v174, %v173
    %v185 = vpack.c.b16 %v176, %v175
    %v186 = vpack.c.b16 %v178, %v177
    %195 = vmatpush.bf16.msra.mxu0 %v186
    %196 = vmatpush.bf16.msra.mxu0 %v185
    %197 = vmatpush.bf16.msra.mxu0 %v184
    %198 = vmatpush.bf16.msra.mxu0 %v183
    %199 = vmatpush.bf16.msra.mxu0 %v182
    %200 = vmatpush.bf16.msra.mxu0 %v181
    %201 = vmatpush.bf16.msra.mxu0 %v180
    %202 = vmatpush.bf16.msra.mxu0 %v179
    %203 = vmatmul.bf16.gmra.mxu0 %v126
    %v204 = vpop.f32.mrf.mxu0
    %v205 = vadd.f32 %v145, %v204
    %v206 = vpop.f32.mrf.mxu0
    %v207 = vadd.f32 %v145, %v206
    %208 = vdwg.mxu0
    %v209 = vmul.f32 %v205, 0.5
    %v210 = vmul.f32 %v207, 0.5
    %v211 = vtanh.pop %v209
    %v212 = vtanh.pop %v210
    %v213 = vadd.f32 %v211, 1.0
    %v214 = vadd.f32 %v212, 1.0
    %v215 = vmul.f32 %v213, 0.5
    %v216 = vmul.f32 %v214, 0.5
    %v217 = vpack.c.bf16 %v216, %v215
    %v218 = vld [vmem:[#allocation8] sm:$0xf]
    %v219 = vld [vmem:[#allocation8 + $0x4] sm:$0xf]
    %v220 = vld [vmem:[#allocation8 + $0x8] sm:$0xf]
    %v221 = vld [vmem:[#allocation8 + $0xc] sm:$0xf]
    %v222 = vld [vmem:[#allocation8 + $0x10] sm:$0xf]
    %v223 = vld [vmem:[#allocation8 + $0x14] sm:$0xf]
    %v224 = vld [vmem:[#allocation8 + $0x18] sm:$0xf]
    %v225 = vld [vmem:[#allocation8 + $0x1c] sm:$0xf]
    %v226 = vld [vmem:[#allocation8 + $0x20] sm:$0xf]
    %v227 = vld [vmem:[#allocation8 + $0x24] sm:$0xf]
    %v228 = vld [vmem:[#allocation8 + $0x28] sm:$0xf]
    %v229 = vld [vmem:[#allocation8 + $0x2c] sm:$0xf]
    %v230 = vld [vmem:[#allocation8 + $0x30] sm:$0xf]
    %v231 = vld [vmem:[#allocation8 + $0x34] sm:$0xf]
    %v232 = vld [vmem:[#allocation8 + $0x38] sm:$0xf]
    %v233 = vld [vmem:[#allocation8 + $0x3c] sm:$0xf]
    %v234 = vld [vmem:[%s6] sm:$0x1]
    %v236 = vperm.slane %v234, 0
    %v254 = vunpack.c.l.b16 %v218
    %v255 = vunpack.c.l.b16 %v219
    %v256 = vunpack.c.l.b16 %v220
    %v257 = vunpack.c.l.b16 %v221
    %v258 = vunpack.c.l.b16 %v222
    %v259 = vunpack.c.l.b16 %v223
    %v260 = vunpack.c.l.b16 %v224
    %v261 = vunpack.c.l.b16 %v225
    %v262 = vunpack.c.l.b16 %v226
    %v263 = vunpack.c.l.b16 %v227
    %v264 = vunpack.c.l.b16 %v228
    %v265 = vunpack.c.l.b16 %v229
    %v266 = vunpack.c.l.b16 %v230
    %v267 = vunpack.c.l.b16 %v231
    %v268 = vunpack.c.l.b16 %v232
    %v269 = vunpack.c.l.b16 %v233
    %v270 = vpack.c.b16 %v255, %v254
    %v271 = vpack.c.b16 %v257, %v256
    %v272 = vpack.c.b16 %v259, %v258
    %v273 = vpack.c.b16 %v261, %v260
    %v274 = vpack.c.b16 %v263, %v262
    %v275 = vpack.c.b16 %v265, %v264
    %v276 = vpack.c.b16 %v267, %v266
    %v277 = vpack.c.b16 %v269, %v268
    %286 = vmatpush.bf16.msra.mxu0 %v277
    %287 = vmatpush.bf16.msra.mxu0 %v276
    %288 = vmatpush.bf16.msra.mxu0 %v275
    %289 = vmatpush.bf16.msra.mxu0 %v274
    %290 = vmatpush.bf16.msra.mxu0 %v273
    %291 = vmatpush.bf16.msra.mxu0 %v272
    %292 = vmatpush.bf16.msra.mxu0 %v271
    %293 = vmatpush.bf16.msra.mxu0 %v270
    %294 = vmatmul.bf16.gmra.mxu0 %v217
    %v295 = vpop.f32.mrf.mxu0
    %v296 = vadd.f32 %v236, %v295
    %v297 = vpop.f32.mrf.mxu0
    %v298 = vadd.f32 %v236, %v297
    %299 = vdwg.mxu0
    %v300 = vpack.c.bf16 %v296, %v296
    %v301 = vpack.c.bf16 %v298, %v298
    %302 = vst [vmem:[#allocation10] sm:$0xf] %v300
    %303 = vst [vmem:[#allocation10 + $0x4] sm:$0xf] %v301
    // Predicated region
    $region46: #{tpu_custom_call.1} parent=1 // pred_check
      _
    $region47: #{tpu_custom_call.1} parent=1 // pred_check_branch
      %305 = sbr.rel (0) target = $region49
    $region48: #{tpu_custom_call.1} parent=1 // pred_region
      %307 = vsyncadd [#allocation4], 0
      %s308 = sshll.u32 [#allocation10], 4
      %s309 = int_to_ptr.vmem [resolvable:$true] %s308
      %s310 = sshll.u32 %s7, 4
      %s311 = int_to_ptr.hbm [resolvable:$true] %s310
      %316 = dma.vmem_to_hbm [thread:$0]  %s309, 128, %s311, [#allocation4], 64, 64, 4
    $region49: #{tpu_custom_call.1} parent=1 // pred_fallthru
      _
    // Predicated region
    $region50: #{tpu_custom_call.1} parent=1 // pred_check
      _
    $region51: #{tpu_custom_call.1} parent=1 // pred_check_branch
      %318 = sbr.rel (0) target = $region53
    $region52: #{tpu_custom_call.1} parent=1 // pred_region
      %320 = dma.done [#allocation4], 128
    $region53: #{tpu_custom_call.1} parent=1 // pred_fallthru
      _
    %321 = vsyncpa [#allocation3], 1
    %322 = vsyncpa [#allocation6], 1
    %323 = vsyncpa [#allocation9], 1
    %324 = vsyncpa [#allocation4], 1

</llo_original>
